<compile_context>
chip_gen: v7x
topology: tpu7x:2x2x1
jax: 0.10.0
libtpu: 0.0.40
codegen_flags: <defaults>
</compile_context>

<pallas_src>
import jax
import jax.numpy as jnp
from jax.experimental import pallas as pl
from jax.experimental.pallas import tpu as pltpu

_EPS = 1e-5  # nn.InstanceNorm2d default


def adain_kernel(x_ref, p_ref, o_ref):
    # x_ref: (TILE_C, H*W)  one channel-tile of one batch element
    # p_ref: (TILE_C, 2)    pre-projected [style_scale, style_bias] columns
    # o_ref: (TILE_C, H*W)
    x = x_ref[...]
    xf = x.astype(jnp.float32)

    # --- instance-norm stats: per-channel mean / biased var over the lane axis ---
    # (H*W lives on the lane axis; Mosaic masks any padded lane tail in the
    #  reductions, so a non-multiple-of-128 H*W stays correct.)
    mean = jnp.mean(xf, axis=-1, keepdims=True)          # (TILE_C, 1)
    xc = xf - mean
    var = jnp.mean(xc * xc, axis=-1, keepdims=True)      # (TILE_C, 1)
    rstd = jax.lax.rsqrt(var + _EPS)                     # (TILE_C, 1)

    # --- pre-projected style parameters ---
    p = p_ref[...].astype(jnp.float32)                   # (TILE_C, 2)
    scale = p[:, 0:1]
    bias = p[:, 1:2]

    a = scale * rstd                                     # (TILE_C, 1)
    if x.dtype == jnp.float32:
        # Reuse the centered tile: out = xc * (scale*rstd) + bias.
        o_ref[...] = (xc * a + bias).astype(o_ref.dtype)
    else:
        # Low-precision epilogue on the raw loaded tile (folded affine):
        # out = x * a + b, a/b broadcast columns cast once to the input dtype.
        # (Best on v6e/v7x bf16 VALUs; on v5e the extra casts are hidden under DMA.)
        b = bias - mean * a                              # (TILE_C, 1) f32
        o_ref[...] = (x * a.astype(x.dtype) + b.astype(x.dtype)).astype(o_ref.dtype)


def _sublane_pack(itemsize):
    # Sublane packing granularity: 8 for 32-bit, 16 for 16-bit, 32 for 8-bit.
    return max(8, 32 // max(1, itemsize))


def _pick_tile_c(C, HW, itemsize):
    """Largest channel tile whose *actual* per-grid-step footprint fits:
      - x block   : TC*HW*itemsize, double-buffered
      - out block : TC*HW*itemsize, double-buffered
      - f32 temps : ~2 full tiles live inside the body
    against a ~4 MiB f32-equivalent per-block target and a ~24 MiB per-step cap
    (safe on v7x's 64 MiB VMEM and v5e's 16 MiB scoped default once
    vmem_limit_bytes is raised explicitly)."""
    pack = _sublane_pack(itemsize)
    block_budget = 4 * 1024 * 1024       # ~4 MiB f32-equivalent per x block
    total_budget = 24 * 1024 * 1024      # v7x-safe per-step VMEM cap

    max_by_block = block_budget // max(1, HW * 4)
    max_by_total = total_budget // max(1, HW * (4 * itemsize + 8))
    max_tc = min(max_by_block, max_by_total)

    if C <= max_tc:
        return C                          # whole-C block (block dim == full dim: allowed)

    tc = (max_tc // pack) * pack
    if tc == 0:
        # Even one sublane-packed row-group exceeds the budget (huge H*W):
        # fall back to the minimum aligned tile (never whole-C) and rely on
        # the raised vmem_limit_bytes below.
        # TODO(synk): HW-split grid axis with sum / sum-of-squares accumulators.
        tc = pack
    return min(tc, C)


def adain(x, style, w_scale, b_scale, w_bias, b_bias, *, tile_c=None):
    """x: (N, C, H, W); style: (N, S); w_*: (C, S) PyTorch (out, in); b_*: (C,)."""
    N, C, H, W = x.shape
    HW = H * W

    # --- wrapper-side style projection (negligible N*S*C matmul), packed so the
    #     kernel gets ONE tiny (TILE_C, 2) parameter block per grid step ---
    stf = style.astype(jnp.float32)
    scale = stf @ w_scale.astype(jnp.float32).T + b_scale.astype(jnp.float32)  # (N, C)
    bias = stf @ w_bias.astype(jnp.float32).T + b_bias.astype(jnp.float32)     # (N, C)
    params = jnp.stack([scale, bias], axis=-1)                                  # (N, C, 2) f32

    x2 = x.reshape(N, C, HW)              # free view for contiguous NCHW

    itemsize = x.dtype.itemsize
    pack = _sublane_pack(itemsize)
    TC = tile_c if tile_c is not None else _pick_tile_c(C, HW, itemsize)

    # v7x megacore: guarantee >= 2 grid steps so both TensorCores get work.
    if tile_c is None and N * pl.cdiv(C, TC) < 2 and C > pack:
        TC = max(pack, ((C // 2) // pack) * pack)

    grid = (N, pl.cdiv(C, TC))

    # Explicit scoped-VMEM limit sized from the real per-step footprint
    # (in x2 + out x2 double-buffered + f32 temps + params), with headroom.
    fp = TC * HW * (4 * itemsize + 8) + 8 * TC * 2 * 4
    vmem_limit = int(min(48 * 1024 * 1024, max(16 * 1024 * 1024, 2 * fp)))

    out = pl.pallas_call(
        adain_kernel,
        out_shape=jax.ShapeDtypeStruct((N, C, HW), x.dtype),
        grid_spec=pltpu.PrefetchScalarGridSpec(
            num_scalar_prefetch=0,
            grid=grid,
            in_specs=[
                pl.BlockSpec((pl.Squeezed(), TC, HW), lambda n, c: (n, c, 0)),
                pl.BlockSpec((pl.Squeezed(), TC, 2), lambda n, c: (n, c, 0)),
            ],
            out_specs=pl.BlockSpec((pl.Squeezed(), TC, HW), lambda n, c: (n, c, 0)),
        ),
        compiler_params=pltpu.CompilerParams(
            dimension_semantics=("parallel", "parallel"),
            vmem_limit_bytes=vmem_limit,
        ),
    )(x2, params)

    return out.reshape(N, C, H, W)


def adain_ref(x, style, w_scale, b_scale, w_bias, b_bias):
    """Pure-JAX reference mirroring the PyTorch forward."""
    mean = jnp.mean(x, axis=(2, 3), keepdims=True)
    var = jnp.mean((x - mean) ** 2, axis=(2, 3), keepdims=True)
    x_norm = (x - mean) / jnp.sqrt(var + _EPS)
    scale = style @ w_scale.T + b_scale          # (N, C)
    bias = style @ w_bias.T + b_bias             # (N, C)
    return x_norm * scale[:, :, None, None] + bias[:, :, None, None]


if __name__ == "__main__":
    N, C, H, W = 2, 4, 16, 16
    S = 8  # style_dim

    key = jax.random.PRNGKey(0)
    kx, ks, k1, k2, k3, k4 = jax.random.split(key, 6)

    x = jax.random.normal(kx, (N, C, H, W), dtype=jnp.float32)
    style = jax.random.normal(ks, (N, S), dtype=jnp.float32)

    # Deterministic "Linear" parameters (PyTorch convention: weight (out, in)).
    bound = 1.0 / (S ** 0.5)
    w_scale = jax.random.uniform(k1, (C, S), jnp.float32, -bound, bound)
    b_scale = jax.random.uniform(k2, (C,), jnp.float32, -bound, bound)
    w_bias = jax.random.uniform(k3, (C, S), jnp.float32, -bound, bound)
    b_bias = jax.random.uniform(k4, (C,), jnp.float32, -bound, bound)

    out = adain(x, style, w_scale, b_scale, w_bias, b_bias)
    out = jax.block_until_ready(out)

    ref = adain_ref(x, style, w_scale, b_scale, w_bias, b_bias)
    assert out.shape == (N, C, H, W)
    assert jnp.allclose(out, ref, atol=1e-4, rtol=1e-4), "mismatch vs reference"

    print("KERNEL_OK")
</pallas_src>

<mosaic_0001>
module attributes {stable_mosaic.version = 11 : i64} {
  func.func @adain_kernel(%arg0: i32, %arg1: i32, %arg2: memref<1x4x256xf32, #tpu.memory_space<vmem>>, %arg3: memref<1x4x2xf32, #tpu.memory_space<vmem>>, %arg4: memref<1x4x256xf32, #tpu.memory_space<vmem>>) attributes {dimension_semantics = [#tpu.dimension_semantics<parallel>, #tpu.dimension_semantics<parallel>], iteration_bounds = array<i64: 2, 1>, scalar_prefetch = 0 : i64, scratch_operands = 0 : i64, tpu.core_type = #tpu.core_type<tc>, window_params = [{transform_indices = @transform_0, window_bounds = array<i64: 1, 4, 256>}, {transform_indices = @transform_1, window_bounds = array<i64: 1, 4, 2>}, {transform_indices = @transform_2, window_bounds = array<i64: 1, 4, 256>}]} {
    %c0 = arith.constant 0 : index
    %c0_0 = arith.constant 0 : index
    %c0_1 = arith.constant 0 : index
    %0 = vector.load %arg2[%c0, %c0_0, %c0_1] : memref<1x4x256xf32, #tpu.memory_space<vmem>>, vector<1x4x256xf32>
    %1 = vector.shape_cast %0 : vector<1x4x256xf32> to vector<4x256xf32>
    %cst = arith.constant dense<0.000000e+00> : vector<4xf32>
    %2 = vector.multi_reduction <add>, %1, %cst [1] : vector<4x256xf32> to vector<4xf32>
    %3 = vector.shape_cast %2 : vector<4xf32> to vector<4x1xf32>
    %cst_2 = arith.constant 2.560000e+02 : f32
    %4 = vector.broadcast %cst_2 : f32 to vector<4x1xf32>
    %5 = arith.divf %3, %4 : vector<4x1xf32>
    %6 = vector.broadcast %5 : vector<4x1xf32> to vector<4x256xf32>
    %7 = arith.subf %1, %6 : vector<4x256xf32>
    %8 = arith.mulf %7, %7 : vector<4x256xf32>
    %cst_3 = arith.constant dense<0.000000e+00> : vector<4xf32>
    %9 = vector.multi_reduction <add>, %8, %cst_3 [1] : vector<4x256xf32> to vector<4xf32>
    %10 = vector.shape_cast %9 : vector<4xf32> to vector<4x1xf32>
    %cst_4 = arith.constant 2.560000e+02 : f32
    %11 = vector.broadcast %cst_4 : f32 to vector<4x1xf32>
    %12 = arith.divf %10, %11 : vector<4x1xf32>
    %cst_5 = arith.constant 9.99999974E-6 : f32
    %13 = vector.broadcast %cst_5 : f32 to vector<4x1xf32>
    %14 = arith.addf %12, %13 : vector<4x1xf32>
    %15 = math.rsqrt %14 : vector<4x1xf32>
    %c0_6 = arith.constant 0 : index
    %c0_7 = arith.constant 0 : index
    %c0_8 = arith.constant 0 : index
    %16 = vector.load %arg3[%c0_6, %c0_7, %c0_8] : memref<1x4x2xf32, #tpu.memory_space<vmem>>, vector<1x4x2xf32>
    %17 = vector.shape_cast %16 : vector<1x4x2xf32> to vector<4x2xf32>
    %18 = vector.extract_strided_slice %17 {offsets = [0, 0], sizes = [4, 1], strides = [1, 1]} : vector<4x2xf32> to vector<4x1xf32>
    %19 = vector.extract_strided_slice %17 {offsets = [0, 1], sizes = [4, 1], strides = [1, 1]} : vector<4x2xf32> to vector<4x1xf32>
    %20 = arith.mulf %18, %15 : vector<4x1xf32>
    %21 = vector.broadcast %20 : vector<4x1xf32> to vector<4x256xf32>
    %22 = arith.mulf %7, %21 : vector<4x256xf32>
    %23 = vector.broadcast %19 : vector<4x1xf32> to vector<4x256xf32>
    %24 = arith.addf %22, %23 : vector<4x256xf32>
    %c0_9 = arith.constant 0 : index
    %c0_10 = arith.constant 0 : index
    %c0_11 = arith.constant 0 : index
    %25 = vector.load %arg4[%c0_9, %c0_10, %c0_11] : memref<1x4x256xf32, #tpu.memory_space<vmem>>, vector<1x4x256xf32>
    %26 = vector.shape_cast %25 : vector<1x4x256xf32> to vector<4x256xf32>
    %27 = vector.shape_cast %24 : vector<4x256xf32> to vector<1x4x256xf32>
    tpu.vector_store %arg4[%c0_9, %c0_10, %c0_11], %27 {strides = array<i32>} : memref<1x4x256xf32, #tpu.memory_space<vmem>>, vector<1x4x256xf32>,
    return
  }
  func.func @transform_0(%arg0: i32, %arg1: i32) -> (i32, i32, i32) {
    %c0_i32 = arith.constant 0 : i32
    %c0_i32_0 = arith.constant 0 : i32
    return %arg0, %arg1, %c0_i32 : i32, i32, i32
  }
  func.func @transform_1(%arg0: i32, %arg1: i32) -> (i32, i32, i32) {
    %c0_i32 = arith.constant 0 : i32
    %c0_i32_0 = arith.constant 0 : i32
    return %arg0, %arg1, %c0_i32 : i32, i32, i32
  }
  func.func @transform_2(%arg0: i32, %arg1: i32) -> (i32, i32, i32) {
    %c0_i32 = arith.constant 0 : i32
    %c0_i32_0 = arith.constant 0 : i32
    return %arg0, %arg1, %c0_i32 : i32, i32, i32
  }
}

</mosaic_0001>

<llo_original>
// kernel: tpu_custom_call.1
$region0: #{tpu_custom_call.1}
  #allocation0 [shape = 'u32[]', space=smem, size = 0x4, offset = 0x4, fixed_abs, tag = 'smem constant byte address 0x4 - core index']
  #allocation1 [shape = 'u32[144,128]{1,0:T(1,128)}', space=vmem, size = 0x12000, scoped, tag = 'internal scratch']
  %s0 = inlined_call_operand.hbm [shape: f32[2,4,256], index: 0, kind: input, shape index: {}]
  %s1 = inlined_call_operand.vmem [shape: f32[2,4,2], index: 1, kind: input, shape index: {}]
  %s2 = inlined_call_operand.hbm [shape: f32[2,4,256], index: 2, kind: output, shape index: {}]
  %s3 = sld [smem:[#allocation0]]
  $region45: #{tpu_custom_call.1} parent=0
    _
  %s5 = ssub.s32 1, %s3
  %s6 = scalar_select 0, %s5, %s3
  $region1: #{tpu_custom_call.1} parent=0
    #allocation2 [shape = 'u8[8192]{0}', space=vmem, size = 0x2000, scoped, tag = 'input window, operand 0']
    #allocation3 [shape = 's32[2]{0}', space=sflag, size = 0x8, scoped, tag = 'scoped memory for tpu_custom_call.1']
    #allocation4 [shape = 's32[2]{0}', space=sflag, size = 0x8, scoped, tag = 'scoped memory for tpu_custom_call.1']
    #allocation5 [shape = 'u8[8192]{0}', space=vmem, size = 0x2000, scoped, tag = 'output window, operand 0']
    %7 = vsyncpa [#allocation3], 0
    %s8 = scalar_lea.sflag [#allocation3], 1
    %9 = vsyncpa %s8, 0
    %10 = vsyncpa [#allocation4], 0
    %s11 = scalar_lea.sflag [#allocation4], 1
    %12 = vsyncpa %s11, 0
    loop: start=0, step=1, limit=4
    $region2: #{tpu_custom_call.1} parent=1 // loop_pre_header
      _
    $region3: #{tpu_custom_call.1} parent=1 // loop_header
      %s14 = sphi 0, %s18
      %p15 = scmp.ge.s32.totalorder %s14, 4
      %s21 = sphi 0, %s33
      %s22 = sphi 0, %s29
      %s23 = sphi 0, %s21
      %s24 = sphi 0, %s22
      %s25 = sphi 0, %s23
      %s26 = sphi 0, %s24
      %s38 = sphi 0, %s40
      %s41 = sphi 0, %s38
      %s42 = sphi 0, %s41
      %s58 = sphi 0, %s42
      %s66 = sphi 0, %s68
      %s69 = sphi 0, %s66
      %s70 = sphi 0, %s69
      %s86 = sphi 0, %s70
      %s94 = sphi 0, %s96
      %s97 = sphi 0, %s94
      %s98 = sphi 0, %s97
      %s114 = sphi 0, %s98
    $region4: #{tpu_custom_call.1} parent=1 // loop_header_branch
      %17 = sbr.rel (%p15) target = $region8
    $region5: #{tpu_custom_call.1} parent=1 // loop_body
      %s19 = ssub.s32 %s14, 1
      %s20 = ssub.s32 %s14, 2
      %s27 = sadd.s32 1, %s22
      %p28 = scmp.ge.s32.totalorder %s27, 1
      %s29 = scalar_select %p28, 0, %s27
      %s30 = sadd.s32 1, %s21
      %s31 = scalar_select %p28, %s30, %s21
      %p32 = scmp.ge.s32.totalorder %s31, 2
      %s33 = scalar_select %p32, 0, %s31
      %s34 = ssub.s32 %s21, %s33
      %s35 = ssub.s32 %s22, %s29
      %s36 = sor.u32 %s34, %s35
      %p37 = scmp.eq.s32.totalorder %s36, 0
      %s39 = sadd.s32 %s38, 1
      %s40 = scalar_select %p37, %s38, %s39
      %p43 = pneg %p37
      %p44 = scmp.eq.s32.totalorder %s14, 1
      %p45 = por %p43, %p44
      %p46 = scmp.ne.s32.totalorder %s38, %s41
      %p47 = scmp.eq.s32.totalorder %s14, 0
      %p48 = por %p46, %p47
      %p49 = scmp.ne.s32.totalorder %s38, %s41
      %p50 = scmp.eq.s32.totalorder %s19, 1
      %p51 = por %p49, %p50
      %p52 = scmp.ne.s32.totalorder %s41, %s42
      %p53 = scmp.eq.s32.totalorder %s19, 0
      %p54 = por %p52, %p53
      %p55 = scmp.ne.s32.totalorder %s41, %s42
      %p56 = scmp.eq.s32.totalorder %s20, 1
      %p57 = por %p55, %p56
      %p59 = scmp.ne.s32.totalorder %s42, %s58
      %p60 = scmp.eq.s32.totalorder %s20, 0
      %p61 = por %p59, %p60
      %s62 = ssub.s32 %s21, %s33
      %s63 = ssub.s32 %s22, %s29
      %s64 = sor.u32 %s62, %s63
      %p65 = scmp.eq.s32.totalorder %s64, 0
      %s67 = sadd.s32 %s66, 1
      %s68 = scalar_select %p65, %s66, %s67
      %p71 = pneg %p65
      %p72 = scmp.eq.s32.totalorder %s14, 1
      %p73 = por %p71, %p72
      %p74 = scmp.ne.s32.totalorder %s66, %s69
      %p75 = scmp.eq.s32.totalorder %s14, 0
      %p76 = por %p74, %p75
      %p77 = scmp.ne.s32.totalorder %s66, %s69
      %p78 = scmp.eq.s32.totalorder %s19, 1
      %p79 = por %p77, %p78
      %p80 = scmp.ne.s32.totalorder %s69, %s70
      %p81 = scmp.eq.s32.totalorder %s19, 0
      %p82 = por %p80, %p81
      %p83 = scmp.ne.s32.totalorder %s69, %s70
      %p84 = scmp.eq.s32.totalorder %s20, 1
      %p85 = por %p83, %p84
      %p87 = scmp.ne.s32.totalorder %s70, %s86
      %p88 = scmp.eq.s32.totalorder %s20, 0
      %p89 = por %p87, %p88
      %s90 = ssub.s32 %s21, %s33
      %s91 = ssub.s32 %s22, %s29
      %s92 = sor.u32 %s90, %s91
      %p93 = scmp.eq.s32.totalorder %s92, 0
      %s95 = sadd.s32 %s94, 1
      %s96 = scalar_select %p93, %s94, %s95
      %p99 = pneg %p93
      %p100 = scmp.eq.s32.totalorder %s14, 1
      %p101 = por %p99, %p100
      %p102 = scmp.ne.s32.totalorder %s94, %s97
      %p103 = scmp.eq.s32.totalorder %s14, 0
      %p104 = por %p102, %p103
      %p105 = scmp.ne.s32.totalorder %s94, %s97
      %p106 = scmp.eq.s32.totalorder %s19, 1
      %p107 = por %p105, %p106
      %p108 = scmp.ne.s32.totalorder %s97, %s98
      %p109 = scmp.eq.s32.totalorder %s19, 0
      %p110 = por %p108, %p109
      %p111 = scmp.ne.s32.totalorder %s97, %s98
      %p112 = scmp.eq.s32.totalorder %s20, 1
      %p113 = por %p111, %p112
      %p115 = scmp.ne.s32.totalorder %s98, %s114
      %p116 = scmp.eq.s32.totalorder %s20, 0
      %p117 = por %p115, %p116
      %p118 = scmp.le.s32.totalorder 1, %s14
      %p119 = scmp.lt.s32.totalorder %s14, 3
      %p120 = pnand %p118, %p119
      %p121 = pneg %p120
      // Predicated region
      $region9: #{tpu_custom_call.1} parent=5 // pred_check
        _
      $region10: #{tpu_custom_call.1} parent=5 // pred_check_branch
        %123 = sbr.rel (%p120) target = $region12
      $region11: #{tpu_custom_call.1} parent=5 // pred_region
        %s124 = ssub.s32 %s14, 1
      $region12: #{tpu_custom_call.1} parent=5 // pred_fallthru
        _
      %p125 = scmp.lt.s32.totalorder %s14, 2
      // Predicated region
      $region13: #{tpu_custom_call.1} parent=5 // pred_check
        %p126 = pneg %p125
      $region14: #{tpu_custom_call.1} parent=5 // pred_check_branch
        %128 = sbr.rel (%p126) target = $region16
      $region15: #{tpu_custom_call.1} parent=5 // pred_region
        // Predicated region
        $region17: #{tpu_custom_call.1} parent=15 // pred_check
          %p129 = pneg %p48
        $region18: #{tpu_custom_call.1} parent=15 // pred_check_branch
          %131 = sbr.rel (%p129) target = $region20
        $region19: #{tpu_custom_call.1} parent=15 // pred_region
          %s132 = sand.u32 %s38, 1
          %s133 = scalar_lea.sflag [#allocation3], %s132
          %s134 = sand.u32 %s38, 1
          %s135 = smul.addr %s134, 8
          %s136 = scalar_lea.vmem [#allocation2], %s135
          %s138 = ssub.s32 128, 128
          %139 = vsyncadd %s133, %s138
          %s140 = smul.addr %s22, 2
          %s141 = smul.addr %s21, 2
          %s142 = sadd.s32 %s140, %s141
          %s143 = smul.addr %s142, 64
          %s144 = scalar_lea.hbm %s0, %s143
          %s146 = sshll.u32 %s136, 4
          %s147 = int_to_ptr.vmem [resolvable:$true] %s146
          %149 = dma.hbm_to_vmem [thread:$0]  %s144, 128, %s147, %s133
        $region20: #{tpu_custom_call.1} parent=15 // pred_fallthru
          _
        // Predicated region
        $region21: #{tpu_custom_call.1} parent=15 // pred_check
          %p150 = pneg %p76
        $region22: #{tpu_custom_call.1} parent=15 // pred_check_branch
          %152 = sbr.rel (%p150) target = $region24
        $region23: #{tpu_custom_call.1} parent=15 // pred_region
          %p153 = scmp.lt.s32.totalorder %s21, 1
          %s154 = scalar_select %p153, %s21, 1
          %p155 = scmp.lt.s32.totalorder %s22, 0
          %s156 = scalar_select %p155, %s22, 0
          %s157 = sadd.s32 %s156, %s154
          %s158 = smul.addr %s157, 4
          %s159 = scalar_lea.vmem %s1, %s158
        $region24: #{tpu_custom_call.1} parent=15 // pred_fallthru
          _
      $region16: #{tpu_custom_call.1} parent=5 // pred_fallthru
        _
      %p160 = scmp.le.s32.totalorder 1, %s14
      %p161 = scmp.lt.s32.totalorder %s14, 3
      %p162 = pnand %p160, %p161
      %p163 = pneg %p162
      // Predicated region
      $region25: #{tpu_custom_call.1} parent=5 // pred_check
        _
      $region26: #{tpu_custom_call.1} parent=5 // pred_check_branch
        %165 = sbr.rel (%p162) target = $region28
      $region27: #{tpu_custom_call.1} parent=5 // pred_region
        %s166 = ssub.s32 %s14, 1
        %s167 = sand.u32 %s41, 1
        %s168 = scalar_lea.sflag [#allocation3], %s167
        %s169 = sand.u32 %s41, 1
        %s170 = smul.addr %s169, 8
        %s171 = scalar_lea.vmem [#allocation2], %s170
        // Predicated region
        $region29: #{tpu_custom_call.1} parent=27 // pred_check
          %p172 = pneg %p54
        $region30: #{tpu_custom_call.1} parent=27 // pred_check_branch
          %174 = sbr.rel (%p172) target = $region32
        $region31: #{tpu_custom_call.1} parent=27 // pred_region
          %175 = dma.done %s168, 128
        $region32: #{tpu_custom_call.1} parent=27 // pred_fallthru
          _
        %s176 = sand.u32 %s41, 1
        %s177 = scalar_lea.sflag [#allocation3], %s176
        %s178 = sand.u32 %s41, 1
        %s179 = smul.addr %s178, 8
        %s180 = scalar_lea.vmem [#allocation2], %s179
        %p181 = pneg %p54
        %p182 = pneg %p51
        %p183 = scmp.lt.s32.totalorder %s23, 1
        %s184 = scalar_select %p183, %s23, 1
        %p185 = scmp.lt.s32.totalorder %s24, 0
        %s186 = scalar_select %p185, %s24, 0
        %s187 = sadd.s32 %s186, %s184
        %s188 = smul.addr %s187, 4
        %s189 = scalar_lea.vmem %s1, %s188
        %p190 = pneg %p82
        %p191 = pneg %p79
        %p192 = pneg %p110
        %p193 = pneg %p107
        %s194 = sand.u32 %s97, 1
        %s195 = scalar_lea.sflag [#allocation4], %s194
        %s196 = sand.u32 %s97, 1
        %s197 = smul.addr %s196, 8
        %s198 = scalar_lea.vmem [#allocation5], %s197
        %p199 = scmp.lt.s32.totalorder %s23, 1
        %s200 = scalar_select %p199, %s23, 1
        %p201 = scmp.lt.s32.totalorder %s24, 0
        %s202 = scalar_select %p201, %s24, 0
        %s203 = sadd.s32 %s202, %s200
        %s204 = smul.addr %s203, 4
        %s205 = scalar_lea.vmem %s1, %s204
        %v206 = vld [vmem:[%s171] sm:$0xff]
        %v208 = vcombine.high %v206, %v206
        %vm210 = vcmask 1043456
        %v211 = vsel %vm210, %v206, 0.0
        %v212 = vsel %vm210, %v208, 0.0
        %v213 = vadd.f32 %v211, %v212
        %214 = vadd.xlane.f32.xlu0 %v213
        %v215 = vpop.xlane.xlu0 %214
        %v216 = vrcp.pop 256.0
        %v217 = vmul.f32 %v215, %v216
        %v220 = vunpack.c.l.s4 839922192
        %v221 = vunpack.c.0.s8 %v220
        %v222 = vlaneseq
        %v223 = vshrl.u32 %v222, 7
        %v224 = vsub.s32 %v221, %v223
        %v225 = vrot.slane %v217, %v224
        %v227 = vsub.f32 %v206, %v225
        %v228 = vmul.f32 %v227, %v227
        %v230 = vcombine.high %v228, %v228
        %v232 = vsel %vm210, %v228, 0.0
        %v233 = vsel %vm210, %v230, 0.0
        %v234 = vadd.f32 %v232, %v233
        %235 = vadd.xlane.f32.xlu0 %v234
        %v236 = vpop.xlane.xlu0 %235
        %v237 = vmul.f32 %v236, %v216
        %v238 = vadd.f32 %v237, 1e-05
        %v239 = vrsqrt.pop %v238
        %v240 = vld [vmem:[%s205] sm:$0xf]
        %v241 = vmul.f32 %v240, %v239
        %243 = vset.pattern.permute.xlu0 0
        %244 = vperm.xlu0 %243, %v241
        %v245 = vpop.permute.xlu0 %244
        %v247 = vunpack.c.l.s4 839922192
        %v248 = vunpack.c.0.s8 %v247
        %v249 = vlaneseq
        %v250 = vshrl.u32 %v249, 7
        %v251 = vsub.s32 %v248, %v250
        %v252 = vrot.slane %v245, %v251
        %v254 = vmul.f32 %v227, %v252
        %256 = vset.pattern.permute.xlu0 1
        %257 = vperm.xlu0 %256, %v240
        %v258 = vpop.permute.xlu0 %257
        %v260 = vunpack.c.l.s4 839922192
        %v261 = vunpack.c.0.s8 %v260
        %v262 = vlaneseq
        %v263 = vshrl.u32 %v262, 7
        %v264 = vsub.s32 %v261, %v263
        %v265 = vrot.slane %v258, %v264
        %v267 = vadd.f32 %v254, %v265
        %268 = vst [vmem:[%s198] sm:$0xff] %v267
        %s269 = sand.u32 %s97, 1
        %s270 = scalar_lea.sflag [#allocation4], %s269
        %s271 = sand.u32 %s97, 1
        %s272 = smul.addr %s271, 8
        %s273 = scalar_lea.vmem [#allocation5], %s272
        // Predicated region
        $region33: #{tpu_custom_call.1} parent=27 // pred_check
          %p274 = pneg %p107
        $region34: #{tpu_custom_call.1} parent=27 // pred_check_branch
          %276 = sbr.rel (%p274) target = $region36
        $region35: #{tpu_custom_call.1} parent=27 // pred_region
          %s278 = ssub.s32 128, 128
          %279 = vsyncadd %s270, %s278
          %s280 = smul.addr %s24, 2
          %s281 = smul.addr %s23, 2
          %s282 = sadd.s32 %s280, %s281
          %s283 = smul.addr %s282, 64
          %s284 = scalar_lea.hbm %s2, %s283
          %s286 = sshll.u32 %s273, 4
          %s287 = int_to_ptr.vmem [resolvable:$true] %s286
          %289 = dma.vmem_to_hbm [thread:$0]  %s287, 128, %s284, %s270
        $region36: #{tpu_custom_call.1} parent=27 // pred_fallthru
          _
      $region28: #{tpu_custom_call.1} parent=5 // pred_fallthru
        _
      %p290 = scmp.le.s32.totalorder 2, %s14
      // Predicated region
      $region37: #{tpu_custom_call.1} parent=5 // pred_check
        %p291 = pneg %p290
      $region38: #{tpu_custom_call.1} parent=5 // pred_check_branch
        %293 = sbr.rel (%p291) target = $region40
      $region39: #{tpu_custom_call.1} parent=5 // pred_region
        %s294 = ssub.s32 %s14, 2
        // Predicated region
        $region41: #{tpu_custom_call.1} parent=39 // pred_check
          %p295 = pneg %p113
        $region42: #{tpu_custom_call.1} parent=39 // pred_check_branch
          %297 = sbr.rel (%p295) target = $region44
        $region43: #{tpu_custom_call.1} parent=39 // pred_region
          %s298 = sand.u32 %s98, 1
          %s299 = scalar_lea.sflag [#allocation4], %s298
          %s300 = sand.u32 %s98, 1
          %s301 = smul.addr %s300, 8
          %s302 = scalar_lea.vmem [#allocation5], %s301
          %303 = dma.done %s299, 128
        $region44: #{tpu_custom_call.1} parent=39 // pred_fallthru
          _
      $region40: #{tpu_custom_call.1} parent=5 // pred_fallthru
        _
    $region6: #{tpu_custom_call.1} parent=1 // loop_footer
      %s18 = sadd.s32 1, %s14
    $region7: #{tpu_custom_call.1} parent=1 // loop_footer_branch
      %13 = sbr.rel target = $region3
    $region8: #{tpu_custom_call.1} parent=1 // loop_exit
      _
    %304 = vsyncpa [#allocation3], 1
    %s305 = scalar_lea.sflag [#allocation3], 1
    %306 = vsyncpa %s305, 1
    %307 = vsyncpa [#allocation4], 1
    %s308 = scalar_lea.sflag [#allocation4], 1
    %309 = vsyncpa %s308, 1

</llo_original>
